<compile_context>
chip_gen: v6e
topology: v6e:2x2x1
jax: 0.10.0
libtpu: 0.0.40
codegen_flags: <defaults>
</compile_context>

<pallas_src>
import numpy as np
import jax
import jax.numpy as jnp
from jax import lax
from jax.experimental import pallas as pl
from jax.experimental.pallas import tpu as pltpu


def _round_up(n, m):
    return ((n + m - 1) // m) * m


def _cdiv(a, b):
    return -(-a // b)


# ~24 MiB of double-buffered tiles per kernel -> fits default/raised scoped VMEM
# on v5e/v6e (128 MiB phys) and v7x (64 MiB phys).
_PIPE_BUDGET = 24 * 1024 * 1024


def _pick_time_chunk(Th, B, D, H):
    """Time-chunk length (multiple of 8) sized from the pipelined-buffer budget."""
    per_t = B * max(80 * H,            # recurrence: 2x2x4H (xproj f/b) + 2x2xH (y f/b), f32
                    8 * D + 64 * H)    # projection: 2xD (x) + 4x4H (two outs), f32
    ct_max = max(8, _PIPE_BUDGET // max(per_t, 1))
    n_chunks = _cdiv(Th, ct_max)
    return _round_up(_cdiv(Th, n_chunks), 8)


def _vmem_params(semantics, need_bytes):
    return pltpu.CompilerParams(
        dimension_semantics=semantics,
        vmem_limit_bytes=min(48 << 20, max(32 << 20, int(1.5 * need_bytes) + (1 << 20))))


# ----------------------------------------------------------------------------
# Kernel 1: hoisted input projection  xproj = x @ [Wih_f | Wih_b] + (b_ih + b_hh)
# One tiled MXU matmul over all timesteps; writes the fwd / bwd gate halves to
# two separate time-major arrays so the recurrence can stream them head-first /
# tail-first independently.
# ----------------------------------------------------------------------------

def _proj_kernel(x_ref, w_ref, b_ref, of_ref, ob_ref):
    g4 = of_ref.shape[-1]
    x = x_ref[...].astype(jnp.bfloat16)                 # bf16 operands, f32 accumulate
    acc = jnp.dot(x, w_ref[...], preferred_element_type=jnp.float32) + b_ref[...]
    of_ref[...] = acc[:, :g4]
    ob_ref[...] = acc[:, g4:]


def _input_projection_tm(x_tm, w, b, cT):
    """x_tm: (Tp, B, D) f32 time-major -> (xproj_f, xproj_b), each (Tp, B, 4H) f32."""
    Tp, B, D = x_tm.shape
    G = w.shape[1]
    G4 = G // 2
    tm = cT * B                                         # one recurrence chunk of rows
    n_tiles = Tp // cT
    x_flat = x_tm.reshape(Tp * B, D)                    # free row-major reshape

    need = 2 * tm * D * 4 + 4 * tm * G4 * 4 + D * G * 2 + G * 4
    out_f, out_b = pl.pallas_call(
        _proj_kernel,
        out_shape=(jax.ShapeDtypeStruct((Tp * B, G4), jnp.float32),
                   jax.ShapeDtypeStruct((Tp * B, G4), jnp.float32)),
        grid=(n_tiles,),
        in_specs=[pl.BlockSpec((tm, D), lambda i: (i, 0)),
                  pl.BlockSpec((D, G), lambda i: (0, 0)),   # weights stay VMEM-resident
                  pl.BlockSpec((1, G), lambda i: (0, 0))],
        out_specs=(pl.BlockSpec((tm, G4), lambda i: (i, 0)),
                   pl.BlockSpec((tm, G4), lambda i: (i, 0))),
        compiler_params=_vmem_params(("parallel",), need),
    )(x_flat, w, b)
    return out_f.reshape(Tp, B, G4), out_b.reshape(Tp, B, G4)


# ----------------------------------------------------------------------------
# Kernel 2: chunked, fused bidirectional LSTM recurrence (packed semantics).
# Grid = (batch blocks [parallel], time chunks [arbitrary]); the fwd stream
# walks chunks head->tail, the bwd stream tail->head (reversed index_map), and
# the (h, c) state for both directions is carried in VMEM scratch.
# ----------------------------------------------------------------------------

def _bilstm_chunk_kernel(len_ref, xpf_ref, xpb_ref, whh_ref,
                         yf_ref, yb_ref, h2_ref, c2_ref):
    cT, Bblk, G4 = xpf_ref.shape                        # G4 = 4H
    H = G4 // 4
    c = pl.program_id(1)
    nC = pl.num_programs(1)

    @pl.when(c == 0)                                    # new batch block: reset state
    def _():
        h2_ref[...] = jnp.zeros_like(h2_ref)
        c2_ref[...] = jnp.zeros_like(c2_ref)

    lens = len_ref[...]                                 # (Bblk, 1) int32
    whh = whh_ref[...]                                  # (2H, 8H) bf16, block-diagonal

    t0_f = c * cT                                       # global start of fwd chunk
    t0_b = (nC - 1 - c) * cT                            # global start of bwd (tail) chunk
    # first H lanes of the (Bblk, 2H) fused state belong to the fwd direction
    half_fwd = lax.broadcasted_iota(jnp.int32, (1, 2 * H), 1) < H

    def step(lt, carry):
        h2, c2 = carry                                  # (Bblk, 2H) f32 each
        lt_b = cT - 1 - lt
        gt_f = t0_f + lt                                # global fwd time (ascending)
        gt_b = t0_b + lt_b                              # global bwd time (descending)

        xp_f = xpf_ref[lt]                              # dense (Bblk, 4H) load
        xp_b = xpb_ref[lt_b]

        # one fused recurrent matmul for both directions
        hdot = jnp.dot(h2.astype(jnp.bfloat16), whh,
                       preferred_element_type=jnp.float32)          # (Bblk, 8H)
        pre_f = xp_f + hdot[:, :G4]
        pre_b = xp_b + hdot[:, G4:]

        # gate order per direction is [i, f, o | g] (columns permuted at init)
        sig_f = jax.nn.sigmoid(pre_f[:, :3 * H])
        sig_b = jax.nn.sigmoid(pre_b[:, :3 * H])
        g_f = jnp.tanh(pre_f[:, 3 * H:])
        g_b = jnp.tanh(pre_b[:, 3 * H:])

        c_f_new = sig_f[:, H:2 * H] * c2[:, :H] + sig_f[:, :H] * g_f
        c_b_new = sig_b[:, H:2 * H] * c2[:, H:] + sig_b[:, :H] * g_b
        c2_new = jnp.concatenate([c_f_new, c_b_new], axis=1)
        tc = jnp.tanh(c2_new)                           # one fused tanh(c) for both dirs
        h_f_new = sig_f[:, 2 * H:] * tc[:, :H]
        h_b_new = sig_b[:, 2 * H:] * tc[:, H:]
        h2_new = jnp.concatenate([h_f_new, h_b_new], axis=1)

        mask_f = gt_f < lens                            # (Bblk, 1)
        mask_b = gt_b < lens
        # pad_packed_sequence: exact zeros past each sequence's length
        yf_ref[lt] = jnp.where(mask_f, h_f_new, 0.0)    # dense (Bblk, H) store
        yb_ref[lt_b] = jnp.where(mask_b, h_b_new, 0.0)

        # freeze state past each length (NaN-safe select)
        mask2 = jnp.where(half_fwd, gt_f, gt_b) < lens  # (Bblk, 2H)
        h2 = jnp.where(mask2, h2_new, h2)
        c2 = jnp.where(mask2, c2_new, c2)
        return h2, c2

    h2, c2 = lax.fori_loop(0, cT, step, (h2_ref[...], c2_ref[...]), unroll=2)
    h2_ref[...] = h2
    c2_ref[...] = c2


def bilstm_time_major(x_tm, lens, p):
    """x_tm: (Th, B, D) f32 time-major; lens: (B,) int32 -> y: (Th, B, 2H) f32."""
    Th, B, D = x_tm.shape
    H = p['whh2'].shape[0] // 2

    cT = _pick_time_chunk(Th, B, D, H)
    Tp = _round_up(Th, cT)
    if Tp != Th:
        x_tm = jnp.pad(x_tm, ((0, Tp - Th), (0, 0), (0, 0)))
    n_chunks = Tp // cT
    nCm1 = n_chunks - 1

    xpf, xpb = _input_projection_tm(x_tm, p['wih_cat'], p['b_cat'], cT)

    # split batch across the two v7x TensorCores when it stays tile-aligned
    Bblk = B // 2 if (B % 16 == 0) else B
    nB = B // Bblk
    lens2d = lens.reshape(B, 1).astype(jnp.int32)

    need = (4 * cT * Bblk * 4 * H * 4          # xpf + xpb, double-buffered
            + 4 * cT * Bblk * H * 4            # yf + yb, double-buffered
            + 2 * (2 * H) * (8 * H) * 2        # fused Whh (bf16)
            + 2 * Bblk * 2 * H * 4 + 4096)     # state scratch + slack

    yf, yb = pl.pallas_call(
        _bilstm_chunk_kernel,
        out_shape=(jax.ShapeDtypeStruct((Tp, B, H), jnp.float32),
                   jax.ShapeDtypeStruct((Tp, B, H), jnp.float32)),
        grid=(nB, n_chunks),
        in_specs=[
            pl.BlockSpec((Bblk, 1), lambda b, c: (b, 0)),                   # lengths
            pl.BlockSpec((cT, Bblk, 4 * H), lambda b, c: (c, b, 0)),        # xproj fwd (head->tail)
            pl.BlockSpec((cT, Bblk, 4 * H), lambda b, c: (nCm1 - c, b, 0)), # xproj bwd (tail->head)
            pl.BlockSpec((2 * H, 8 * H), lambda b, c: (0, 0)),              # fused Whh, resident
        ],
        out_specs=(
            pl.BlockSpec((cT, Bblk, H), lambda b, c: (c, b, 0)),
            pl.BlockSpec((cT, Bblk, H), lambda b, c: (nCm1 - c, b, 0)),
        ),
        scratch_shapes=[pltpu.VMEM((Bblk, 2 * H), jnp.float32),   # [h_f | h_b]
                        pltpu.VMEM((Bblk, 2 * H), jnp.float32)],  # [c_f | c_b]
        compiler_params=_vmem_params(("parallel", "arbitrary"), need),
    )(lens2d, xpf, xpb, p['whh2'])

    return jnp.concatenate([yf, yb], axis=-1)[:Th]


# ----------------------------------------------------------------------------
# pBLSTM forward (truncation / layout glue in XLA, compute in Pallas kernels)
# ----------------------------------------------------------------------------

def pblstm_forward(x, lx, params, trunc='concat'):
    B, T, F = x.shape
    Th = T // 2
    x = x[:, :Th * 2, :]
    lout = lx.astype(jnp.int32) // 2
    if trunc == 'mean':
        x = x.reshape(B, Th, 2, F).mean(axis=2)
    elif trunc == 'max':
        x = x.reshape(B, Th, 2, F).max(axis=2)
    else:  # 'concat' (module default)
        x = x.reshape(B, Th, 2 * F)
    # time-major layout: transpose only the *small* input tensor
    x_tm = jnp.transpose(x, (1, 0, 2))
    y_tm = bilstm_time_major(x_tm, lout, params)
    out = jnp.transpose(y_tm, (1, 0, 2))                # batch-first (B, Th, 2H)
    return out, lout


# ----------------------------------------------------------------------------
# Parameter init mirroring nn.LSTM(bidirectional=True) + kernel layouts
# ----------------------------------------------------------------------------

def _uniform(key, shape, scale):
    return jax.random.uniform(key, shape, jnp.float32, -scale, scale)


def init_pblstm_params(key, lstm_input_dim, H):
    scale = 1.0 / np.sqrt(H)
    keys = jax.random.split(key, 8)
    # torch gate order [i, f, g, o] -> kernel order [i, f, o, g]
    perm = np.concatenate([np.arange(0, 2 * H), np.arange(3 * H, 4 * H),
                           np.arange(2 * H, 3 * H)])
    wih_cols, b_cols, whh_perm, ref = [], [], [], {}
    for d, sfx in enumerate(('f', 'b')):
        base = 4 * d
        w_ih = _uniform(keys[base + 0], (4 * H, lstm_input_dim), scale)
        w_hh = _uniform(keys[base + 1], (4 * H, H), scale)
        b_ih = _uniform(keys[base + 2], (4 * H,), scale)
        b_hh = _uniform(keys[base + 3], (4 * H,), scale)
        # MXU operands are bf16; keep bf16-rounded f32 copies for the reference
        w_ih = w_ih.astype(jnp.bfloat16).astype(jnp.float32)
        w_hh = w_hh.astype(jnp.bfloat16).astype(jnp.float32)
        b = b_ih + b_hh
        ref['wih_' + sfx], ref['whh_' + sfx], ref['b_' + sfx] = w_ih, w_hh, b
        wih_cols.append(w_ih.T[:, perm])                     # (D, 4H) permuted
        b_cols.append(b[perm])
        whh_perm.append(w_hh.T[:, perm])                     # (H, 4H) permuted
    p = {}
    p['wih_cat'] = jnp.concatenate(wih_cols, axis=1).astype(jnp.bfloat16)    # (D, 8H)
    p['b_cat'] = jnp.concatenate(b_cols)[None, :]                            # (1, 8H) f32
    z = jnp.zeros((H, 4 * H), jnp.float32)
    p['whh2'] = jnp.concatenate(                                             # (2H, 8H) block-diag
        [jnp.concatenate([whh_perm[0], z], axis=1),
         jnp.concatenate([z, whh_perm[1]], axis=1)], axis=0).astype(jnp.bfloat16)
    p['ref'] = ref
    return p


# ----------------------------------------------------------------------------
# Pure-JAX reference (packed-sequence semantics) for the numerical check
# ----------------------------------------------------------------------------

def _reference_pblstm(x, lx, p, trunc='concat'):
    B, T, F = x.shape
    Th = T // 2
    x = x[:, :Th * 2, :]
    lout = jnp.asarray(lx, jnp.int32) // 2
    if trunc == 'mean':
        x = x.reshape(B, Th, 2, F).mean(axis=2)
    elif trunc == 'max':
        x = x.reshape(B, Th, 2, F).max(axis=2)
    else:
        x = x.reshape(B, Th, 2 * F)
    r = p['ref']
    H = r['whh_f'].shape[1]

    def run_dir(wih, whh, b, reverse):
        h = jnp.zeros((B, H), jnp.float32)
        c = jnp.zeros((B, H), jnp.float32)
        ys = [None] * Th
        ts = range(Th - 1, -1, -1) if reverse else range(Th)
        for t in ts:
            pre = x[:, t] @ wih.T + h @ whh.T + b        # torch gate order i, f, g, o
            i = jax.nn.sigmoid(pre[:, :H])
            f = jax.nn.sigmoid(pre[:, H:2 * H])
            g = jnp.tanh(pre[:, 2 * H:3 * H])
            o = jax.nn.sigmoid(pre[:, 3 * H:])
            c_new = f * c + i * g
            h_new = o * jnp.tanh(c_new)
            m = (t < lout)[:, None]
            ys[t] = jnp.where(m, h_new, 0.0)
            h = jnp.where(m, h_new, h)
            c = jnp.where(m, c_new, c)
        return jnp.stack(ys, axis=1)

    y_f = run_dir(r['wih_f'], r['whh_f'], r['b_f'], False)
    y_b = run_dir(r['wih_b'], r['whh_b'], r['b_b'], True)
    return jnp.concatenate([y_f, y_b], axis=-1), lout


# ----------------------------------------------------------------------------

if __name__ == "__main__":
    B, T, FEAT, H = 2, 16, 16, 32

    root = jax.random.PRNGKey(0)
    k_x, k_p1, k_p2 = jax.random.split(root, 3)
    x = jax.random.normal(k_x, (B, T, FEAT), jnp.float32)
    x_len = jnp.array([16, 12], jnp.int32)

    # trunc='concat' (module default): internal BiLSTM consumes 2*FEAT features.
    params_c = init_pblstm_params(k_p1, 2 * FEAT, H)
    out, lout = pblstm_forward(x, x_len, params_c, trunc='concat')
    jax.block_until_ready((out, lout))
    assert out.shape == (B, T // 2, 2 * H), out.shape
    assert lout.shape == (B,), lout.shape
    assert int(lout[0]) == 8 and int(lout[1]) == 6, lout
    # pad_packed_sequence semantics: outputs past each length are exactly zero.
    assert float(jnp.max(jnp.abs(out[1, 6:, :]))) == 0.0
    ref, _ = _reference_pblstm(x, x_len, params_c, trunc='concat')
    err = float(jnp.max(jnp.abs(out - ref)))
    assert err < 5e-2, f"concat max|diff| = {err}"

    # trunc='mean' path (BiLSTM consumes FEAT features).
    params_m = init_pblstm_params(k_p2, FEAT, H)
    out_m, lout_m = pblstm_forward(x, x_len, params_m, trunc='mean')
    jax.block_until_ready((out_m, lout_m))
    assert out_m.shape == (B, T // 2, 2 * H), out_m.shape
    ref_m, _ = _reference_pblstm(x, x_len, params_m, trunc='mean')
    err_m = float(jnp.max(jnp.abs(out_m - ref_m)))
    assert err_m < 5e-2, f"mean max|diff| = {err_m}"

    print("KERNEL_OK")
</pallas_src>

<mosaic_0001>
module attributes {stable_mosaic.version = 11 : i64} {
  func.func @_proj_kernel(%arg0: i32, %arg1: memref<16x32xf32, #tpu.memory_space<vmem>>, %arg2: memref<32x256xbf16, #tpu.memory_space<vmem>>, %arg3: memref<1x256xf32, #tpu.memory_space<vmem>>, %arg4: memref<16x128xf32, #tpu.memory_space<vmem>>, %arg5: memref<16x128xf32, #tpu.memory_space<vmem>>) attributes {dimension_semantics = [#tpu.dimension_semantics<parallel>], iteration_bounds = array<i64: 1>, scalar_prefetch = 0 : i64, scratch_operands = 0 : i64, tpu.core_type = #tpu.core_type<tc>, window_params = [{transform_indices = @transform_0, window_bounds = array<i64: 16, 32>}, {pipeline_mode = #tpu.pipeline_mode<synchronous>, transform_indices = @transform_1, window_bounds = array<i64: 32, 256>}, {pipeline_mode = #tpu.pipeline_mode<synchronous>, transform_indices = @transform_2, window_bounds = array<i64: 1, 256>}, {transform_indices = @transform_3, window_bounds = array<i64: 16, 128>}, {transform_indices = @transform_4, window_bounds = array<i64: 16, 128>}]} {
    %c0 = arith.constant 0 : index
    %c0_0 = arith.constant 0 : index
    %0 = vector.load %arg1[%c0, %c0_0] : memref<16x32xf32, #tpu.memory_space<vmem>>, vector<16x32xf32>
    %1 = arith.truncf %0 : vector<16x32xf32> to vector<16x32xbf16>
    %c0_1 = arith.constant 0 : index
    %c0_2 = arith.constant 0 : index
    %2 = vector.load %arg2[%c0_1, %c0_2] : memref<32x256xbf16, #tpu.memory_space<vmem>>, vector<32x256xbf16>
    %cst = arith.constant dense<0.000000e+00> : vector<16x256xf32>
    %3 = tpu.matmul %1, %2, %cst {dimension_numbers = #tpu.dot_dimension_numbers<[1], [0], [0], [1], [0, 0, 1, 1], [], []>} : vector<16x32xbf16>, vector<32x256xbf16>, vector<16x256xf32> -> vector<16x256xf32>
    %c0_3 = arith.constant 0 : index
    %c0_4 = arith.constant 0 : index
    %4 = vector.load %arg3[%c0_3, %c0_4] : memref<1x256xf32, #tpu.memory_space<vmem>>, vector<1x256xf32>
    %5 = vector.broadcast %4 : vector<1x256xf32> to vector<16x256xf32>
    %6 = arith.addf %3, %5 : vector<16x256xf32>
    %7 = vector.extract_strided_slice %6 {offsets = [0, 0], sizes = [16, 128], strides = [1, 1]} : vector<16x256xf32> to vector<16x128xf32>
    %c0_5 = arith.constant 0 : index
    %c0_6 = arith.constant 0 : index
    %8 = vector.load %arg4[%c0_5, %c0_6] : memref<16x128xf32, #tpu.memory_space<vmem>>, vector<16x128xf32>
    tpu.vector_store %arg4[%c0_5, %c0_6], %7 {strides = array<i32>} : memref<16x128xf32, #tpu.memory_space<vmem>>, vector<16x128xf32>,
    %9 = vector.extract_strided_slice %6 {offsets = [0, 128], sizes = [16, 128], strides = [1, 1]} : vector<16x256xf32> to vector<16x128xf32>
    %c0_7 = arith.constant 0 : index
    %c0_8 = arith.constant 0 : index
    %10 = vector.load %arg5[%c0_7, %c0_8] : memref<16x128xf32, #tpu.memory_space<vmem>>, vector<16x128xf32>
    tpu.vector_store %arg5[%c0_7, %c0_8], %9 {strides = array<i32>} : memref<16x128xf32, #tpu.memory_space<vmem>>, vector<16x128xf32>,
    return
  }
  func.func @transform_0(%arg0: i32) -> (i32, i32) {
    %c0_i32 = arith.constant 0 : i32
    %c0_i32_0 = arith.constant 0 : i32
    return %arg0, %c0_i32 : i32, i32
  }
  func.func @transform_1(%arg0: i32) -> (i32, i32) {
    %c0_i32 = arith.constant 0 : i32
    %c0_i32_0 = arith.constant 0 : i32
    %c0_i32_1 = arith.constant 0 : i32
    return %c0_i32, %c0_i32_0 : i32, i32
  }
  func.func @transform_2(%arg0: i32) -> (i32, i32) {
    %c0_i32 = arith.constant 0 : i32
    %c0_i32_0 = arith.constant 0 : i32
    %c0_i32_1 = arith.constant 0 : i32
    return %c0_i32, %c0_i32_0 : i32, i32
  }
  func.func @transform_3(%arg0: i32) -> (i32, i32) {
    %c0_i32 = arith.constant 0 : i32
    %c0_i32_0 = arith.constant 0 : i32
    return %arg0, %c0_i32 : i32, i32
  }
  func.func @transform_4(%arg0: i32) -> (i32, i32) {
    %c0_i32 = arith.constant 0 : i32
    %c0_i32_0 = arith.constant 0 : i32
    return %arg0, %c0_i32 : i32, i32
  }
}

</mosaic_0001>

<llo_original>
// kernel: tpu_custom_call.1
$region0: #{tpu_custom_call.1}
  #allocation0 [shape = 'u32[]', space=smem, size = 0x4, offset = 0x4, fixed_abs, tag = 'smem constant byte address 0x4 - core index']
  #allocation1 [shape = 'u32[144,128]{1,0:T(1,128)}', space=vmem, size = 0x12000, scoped, tag = 'internal scratch']
  %s0 = inlined_call_operand.hbm [shape: f32[16,32], index: 0, kind: input, shape index: {}]
  %s1 = inlined_call_operand.hbm [shape: bf16[32,256], index: 1, kind: input, shape index: {}]
  %s2 = inlined_call_operand.vmem [shape: f32[1,256], index: 2, kind: input, shape index: {}]
  %s3 = inlined_call_operand.hbm [shape: f32[16,128], index: 3, kind: output, shape index: {0}]
  %s4 = inlined_call_operand.hbm [shape: f32[16,128], index: 4, kind: output, shape index: {1}]
  %5 = xla_tuple %s3, %s4
  %s6 = sld [smem:[#allocation0]]
  $region38: #{tpu_custom_call.1} parent=0
    _
  %s8 = ssub.s32 1, %s6
  %s9 = scalar_select 0, %s8, %s6
  $region1: #{tpu_custom_call.1} parent=0
    #allocation2 [shape = 'u8[8192]{0}', space=vmem, size = 0x2000, scoped, tag = 'input window, operand 0, single buffered']
    #allocation3 [shape = 's32[1]{0}', space=sflag, size = 0x4, scoped, tag = 'scoped memory for tpu_custom_call.1']
    #allocation4 [shape = 's32[1]{0}', space=sflag, size = 0x4, scoped, tag = 'scoped memory for tpu_custom_call.1']
    #allocation5 [shape = 'u8[16384]{0}', space=vmem, size = 0x4000, scoped, tag = 'input window, operand 1, single buffered']
    #allocation6 [shape = 's32[1]{0}', space=sflag, size = 0x4, scoped, tag = 'scoped memory for tpu_custom_call.1']
    #allocation7 [shape = 'u8[8192]{0}', space=vmem, size = 0x2000, scoped, tag = 'output window, operand 0, single buffered']
    #allocation8 [shape = 'u8[8192]{0}', space=vmem, size = 0x2000, scoped, tag = 'output window, operand 1, single buffered']
    #allocation9 [shape = 's32[1]{0}', space=sflag, size = 0x4, scoped, tag = 'scoped memory for tpu_custom_call.1']
    %10 = vsyncpa [#allocation3], 0
    %11 = vsyncpa [#allocation6], 0
    %12 = vsyncpa [#allocation4], 0
    %13 = vsyncpa [#allocation9], 0
    // Predicated region
    $region2: #{tpu_custom_call.1} parent=1 // pred_check
      _
    $region3: #{tpu_custom_call.1} parent=1 // pred_check_branch
      %15 = sbr.rel (0) target = $region5
    $region4: #{tpu_custom_call.1} parent=1 // pred_region
      %s17 = ssub.s32 256, 256
      %18 = vsyncadd [#allocation3], %s17
      %s19 = sshll.u32 [#allocation2], 4
      %s20 = int_to_ptr.vmem [resolvable:$true] %s19
      %25 = dma.hbm_to_vmem [thread:$0]  %s0, 256, %s20, [#allocation3], 128, 128, 8
    $region5: #{tpu_custom_call.1} parent=1 // pred_fallthru
      _
    // Predicated region
    $region6: #{tpu_custom_call.1} parent=1 // pred_check
      _
    $region7: #{tpu_custom_call.1} parent=1 // pred_check_branch
      %27 = sbr.rel (0) target = $region9
    $region8: #{tpu_custom_call.1} parent=1 // pred_region
      %s29 = ssub.s32 512, 512
      %30 = vsyncadd [#allocation6], %s29
      %s31 = sshll.u32 [#allocation5], 4
      %s32 = int_to_ptr.vmem [resolvable:$true] %s31
      %37 = dma.hbm_to_vmem [thread:$0]  %s1, 512, %s32, [#allocation6], 128, 128, 8
    $region9: #{tpu_custom_call.1} parent=1 // pred_fallthru
      _
    // Predicated region
    $region10: #{tpu_custom_call.1} parent=1 // pred_check
      _
    $region11: #{tpu_custom_call.1} parent=1 // pred_check_branch
      %39 = sbr.rel (0) target = $region13
    $region12: #{tpu_custom_call.1} parent=1 // pred_region
      _
    $region13: #{tpu_custom_call.1} parent=1 // pred_fallthru
      _
    // Predicated region
    $region14: #{tpu_custom_call.1} parent=1 // pred_check
      _
    $region15: #{tpu_custom_call.1} parent=1 // pred_check_branch
      %41 = sbr.rel (0) target = $region17
    $region16: #{tpu_custom_call.1} parent=1 // pred_region
      %42 = dma.done [#allocation3], 256
    $region17: #{tpu_custom_call.1} parent=1 // pred_fallthru
      _
    // Predicated region
    $region18: #{tpu_custom_call.1} parent=1 // pred_check
      _
    $region19: #{tpu_custom_call.1} parent=1 // pred_check_branch
      %44 = sbr.rel (0) target = $region21
    $region20: #{tpu_custom_call.1} parent=1 // pred_region
      %45 = dma.done [#allocation6], 512
    $region21: #{tpu_custom_call.1} parent=1 // pred_fallthru
      _
    %v47 = vld [vmem:[#allocation2] sm:$0xff]
    %v48 = vld [vmem:[#allocation2 + $0x8] sm:$0xff]
    %v49 = vpack.c.bf16 %v48, %v47
    %v50 = vld [vmem:[#allocation5] sm:$0xff]
    %v51 = vld [vmem:[#allocation5 + $0x8] sm:$0xff]
    %v52 = vld [vmem:[#allocation5 + $0x10] sm:$0xff]
    %v53 = vld [vmem:[#allocation5 + $0x18] sm:$0xff]
    %v54 = vld [vmem:[%s2] sm:$0x3]
    %v56 = vlaneseq
    %v57 = vshrl.u32 %v56, 7
    %v58 = vsub.s32 0, %v57
    %v59 = vrot.slane %v54, %v58
    %v60 = vlaneseq
    %v61 = vshrl.u32 %v60, 7
    %v62 = vsub.s32 1, %v61
    %v63 = vrot.slane %v54, %v62
    %v70 = vunpack.c.l.b16 %v50
    %v71 = vunpack.c.h.b16 %v50
    %v72 = vunpack.c.l.b16 %v51
    %v73 = vunpack.c.h.b16 %v51
    %v74 = vunpack.c.l.b16 %v52
    %v75 = vunpack.c.h.b16 %v52
    %v76 = vunpack.c.l.b16 %v53
    %v77 = vunpack.c.h.b16 %v53
    %v78 = vpack.c.b16 %v72, %v70
    %v79 = vpack.c.b16 %v73, %v71
    %v80 = vpack.c.b16 %v76, %v74
    %v81 = vpack.c.b16 %v77, %v75
    %vm86 = vcmask 261120
    %v88 = vsel %vm86, %v49, 0
    %90 = vmatprep.subr.bf16.mxu0 0
    %91 = vmatpush1.bf16.msra.mxu0 0
    %92 = vmatprep.subr.bf16.mxu0 0
    %93 = vmatpush1.bf16.msra.mxu0 0
    %94 = vmatprep.subr.bf16.mxu0 0
    %95 = vmatpush1.bf16.msra.mxu0 0
    %96 = vmatprep.subr.bf16.mxu0 0
    %97 = vmatpush1.bf16.msra.mxu0 0
    %98 = vmatprep.subr.bf16.mxu0 0
    %99 = vmatpush1.bf16.msra.mxu0 0
    %100 = vmatprep.subr.bf16.mxu0 0
    %101 = vmatpush1.bf16.msra.mxu0 0
    %102 = vmatprep.subr.bf16.mxu0 %v81
    %103 = vmatpush1.bf16.msra.mxu0 %v80
    %104 = vmatprep.subr.bf16.mxu0 %v79
    %105 = vmatpush1.bf16.msra.mxu0 %v78
    %106 = vmatprep.subr.bf16.mxu0 0
    %107 = vmatpush2.bf16.msra.mxu0 0
    %108 = vmatprep.subr.bf16.mxu0 0
    %109 = vmatpush2.bf16.msra.mxu0 0
    %110 = vmatprep.subr.bf16.mxu0 0
    %111 = vmatpush2.bf16.msra.mxu0 0
    %112 = vmatprep.subr.bf16.mxu0 0
    %113 = vmatpush2.bf16.msra.mxu0 0
    %114 = vmatprep.subr.bf16.mxu0 0
    %115 = vmatpush2.bf16.msra.mxu0 0
    %116 = vmatprep.subr.bf16.mxu0 0
    %117 = vmatpush2.bf16.msra.mxu0 0
    %118 = vmatprep.subr.bf16.mxu0 0
    %119 = vmatpush2.bf16.msra.mxu0 0
    %120 = vmatprep.subr.bf16.mxu0 0
    %121 = vmatpush2.bf16.msra.mxu0 0
    %122 = vmatprep.mubr.bf16.mxu0 0
    %123 = vmatmul.mubr.bf16.gmra.mxu0 %v88
    %v124 = vpop.f32.mrf.mxu0
    %v125 = vadd.f32 %v59, %v124
    %v126 = vpop.f32.mrf.mxu0
    %v127 = vadd.f32 %v63, %v126
    %v128 = vpop.f32.mrf.mxu0
    %v129 = vadd.f32 %v59, %v128
    %v130 = vpop.f32.mrf.mxu0
    %v131 = vadd.f32 %v63, %v130
    %132 = vdwg.mxu0
    %133 = vst [vmem:[#allocation7] sm:$0xff] %v125
    %134 = vst [vmem:[#allocation7 + $0x8] sm:$0xff] %v129
    %135 = vst [vmem:[#allocation8] sm:$0xff] %v127
    %136 = vst [vmem:[#allocation8 + $0x8] sm:$0xff] %v131
    // Predicated region
    $region22: #{tpu_custom_call.1} parent=1 // pred_check
      _
    $region23: #{tpu_custom_call.1} parent=1 // pred_check_branch
      %138 = sbr.rel (0) target = $region25
    $region24: #{tpu_custom_call.1} parent=1 // pred_region
      %s140 = ssub.s32 256, 256
      %141 = vsyncadd [#allocation4], %s140
      %s142 = sshll.u32 [#allocation7], 4
      %s143 = int_to_ptr.vmem [resolvable:$true] %s142
      %148 = dma.vmem_to_hbm [thread:$0]  %s143, 256, %s3, [#allocation4], 128, 128, 8
    $region25: #{tpu_custom_call.1} parent=1 // pred_fallthru
      _
    // Predicated region
    $region26: #{tpu_custom_call.1} parent=1 // pred_check
      _
    $region27: #{tpu_custom_call.1} parent=1 // pred_check_branch
      %150 = sbr.rel (0) target = $region29
    $region28: #{tpu_custom_call.1} parent=1 // pred_region
      %s152 = ssub.s32 256, 256
      %153 = vsyncadd [#allocation9], %s152
      %s154 = sshll.u32 [#allocation8], 4
      %s155 = int_to_ptr.vmem [resolvable:$true] %s154
      %160 = dma.vmem_to_hbm [thread:$0]  %s155, 256, %s4, [#allocation9], 128, 128, 8
    $region29: #{tpu_custom_call.1} parent=1 // pred_fallthru
      _
    // Predicated region
    $region30: #{tpu_custom_call.1} parent=1 // pred_check
      _
    $region31: #{tpu_custom_call.1} parent=1 // pred_check_branch
      %162 = sbr.rel (0) target = $region33
    $region32: #{tpu_custom_call.1} parent=1 // pred_region
      %163 = dma.done [#allocation4], 256
    $region33: #{tpu_custom_call.1} parent=1 // pred_fallthru
      _
    // Predicated region
    $region34: #{tpu_custom_call.1} parent=1 // pred_check
      _
    $region35: #{tpu_custom_call.1} parent=1 // pred_check_branch
      %165 = sbr.rel (0) target = $region37
    $region36: #{tpu_custom_call.1} parent=1 // pred_region
      %166 = dma.done [#allocation9], 256
    $region37: #{tpu_custom_call.1} parent=1 // pred_fallthru
      _
    %167 = vsyncpa [#allocation3], 1
    %168 = vsyncpa [#allocation6], 1
    %169 = vsyncpa [#allocation4], 1
    %170 = vsyncpa [#allocation9], 1

</llo_original>
